<compile_context>
chip_gen: v7x
topology: tpu7x:2x2x1
jax: 0.10.0
libtpu: 0.0.40
codegen_flags: <defaults>
</compile_context>

<pallas_src>
import functools

import jax
import jax.numpy as jnp
from jax import lax
from jax.experimental import pallas as pl
from jax.experimental.pallas import tpu as pltpu


def _focal_kernel(logits_ref, targets_ref, out_ref, *, gamma, hw, need_mask):
    # logits_ref: (1, C, S, 128)   targets_ref: (1, S, 128) int   out_ref: (1, 1, 8, 128)
    C = logits_ref.shape[1]
    S = logits_ref.shape[2]
    j = pl.program_id(1)

    t = targets_ref[0]                                       # (S, 128)

    # ---- class reduction: unrolled loop over dense (S,128) slices ----
    m = logits_ref[0, 0].astype(jnp.float32)
    for c in range(1, C):
        m = jnp.maximum(m, logits_ref[0, c].astype(jnp.float32))

    ssum = jnp.zeros((S, 128), jnp.float32)
    tgt_logit = jnp.zeros((S, 128), jnp.float32)
    for c in range(C):
        xc = logits_ref[0, c].astype(jnp.float32)
        ssum = ssum + jnp.exp(xc - m)
        tgt_logit = tgt_logit + jnp.where(t == c, xc, 0.0)

    logpt = (tgt_logit - m) - jnp.log(ssum)                  # = -CE per pixel
    pt = jnp.exp(logpt)
    omp = 1.0 - pt

    # ---- (1 - pt)**gamma : multiply chain for small integer gamma ----
    if float(gamma) == int(gamma) and 0 <= int(gamma) <= 8:
        gi = int(gamma)
        if gi == 0:
            w = jnp.ones_like(omp)
        else:
            w = omp
            for _ in range(gi - 1):
                w = w * omp
    else:
        w = omp ** gamma

    focal = -w * logpt                                       # (S, 128)

    # ---- mask padded / out-of-bounds pixels (only when needed) ----
    if need_mask:
        row = lax.broadcasted_iota(jnp.int32, (S, 128), 0)
        lane = lax.broadcasted_iota(jnp.int32, (S, 128), 1)
        pix = (j * S + row) * 128 + lane
        focal = jnp.where(pix < hw, focal, 0.0)

    # ---- in-kernel partial reduction to one aligned (8,128) tile ----
    if S % 8 == 0:
        partial = focal.reshape(S // 8, 8, 128).sum(axis=0)
    else:
        rowsum = jnp.sum(focal, axis=0, keepdims=True)       # (1, 128)
        sub = lax.broadcasted_iota(jnp.int32, (8, 128), 0)
        partial = jnp.where(sub == 0, rowsum, 0.0)
    out_ref[0, 0] = partial


def focal_loss(inputs, targets, *, alpha=1.0, gamma=2.0, tile_rows=None):
    """inputs: (N, C, H, W) float logits (f32 or bf16, native NCHW layout)
       targets: (N, H, W) integer class indices
       returns: scalar f32 == alpha * mean(focal), matching FocalLoss.forward."""
    N, C, H, W = inputs.shape
    HW = H * W
    M = N * HW

    if not jnp.issubdtype(targets.dtype, jnp.integer):
        targets = targets.astype(jnp.int32)

    # Free reshapes to a pixel-dense rows-of-128 layout; pad only when HW
    # is not already a multiple of 128 (rare for real segmentation sizes).
    HW_pad = ((HW + 127) // 128) * 128
    logits = inputs.reshape(N, C, HW)
    tgt = targets.reshape(N, HW)
    if HW_pad != HW:
        logits = jnp.pad(logits, ((0, 0), (0, 0), (0, HW_pad - HW)))
        tgt = jnp.pad(tgt, ((0, 0), (0, HW_pad - HW)))
    R = HW_pad // 128
    logits = logits.reshape(N, C, R, 128)
    tgt = tgt.reshape(N, R, 128)

    # ---- pixel-tile (sublane-row) size selection ----
    itemsize = inputs.dtype.itemsize
    if tile_rows is not None:
        S = tile_rows
    elif R <= 8:
        S = R                                    # full extent: always legal
    else:
        target_bytes = 2 << 20                   # ~2 MiB logit blocks
        S = max(8, (target_bytes // (C * 128 * itemsize)) // 8 * 8)
        S = min(S, (R // 8) * 8, 2048)           # cap working set (v7x 64 MiB VMEM)
        # keep >= ~8 grid steps so both v7x TensorCores get work + pipelining
        while N * pl.cdiv(R, S) < 8 and S > 8:
            S_new = max(8, ((S // 2) // 8) * 8)
            if S_new == S:
                break
            S = S_new
    n_tiles = pl.cdiv(R, S)

    need_mask = (HW != HW_pad) or (R % S != 0)
    kernel = functools.partial(_focal_kernel, gamma=float(gamma), hw=HW,
                               need_mask=need_mask)

    partials = pl.pallas_call(
        kernel,
        out_shape=jax.ShapeDtypeStruct((N, n_tiles, 8, 128), jnp.float32),
        grid_spec=pltpu.PrefetchScalarGridSpec(
            num_scalar_prefetch=0,
            grid=(N, n_tiles),
            in_specs=[
                pl.BlockSpec((1, C, S, 128), lambda n, j: (n, 0, j, 0)),
                pl.BlockSpec((1, S, 128), lambda n, j: (n, j, 0)),
            ],
            out_specs=pl.BlockSpec((1, 1, 8, 128), lambda n, j: (n, j, 0, 0)),
        ),
        compiler_params=pltpu.CompilerParams(
            dimension_semantics=("parallel", "parallel"),
            vmem_limit_bytes=32 * 1024 * 1024,
        ),
    )(logits, tgt)

    return (float(alpha) * jnp.sum(partials) / float(M)).astype(jnp.float32)


def _reference(inputs, targets, *, alpha=1.0, gamma=2.0):
    # pure-JAX reference mirroring torch semantics
    N, C, H, W = inputs.shape
    x = jnp.transpose(inputs, (0, 2, 3, 1)).reshape(-1, C).astype(jnp.float32)
    t = targets.reshape(-1).astype(jnp.int32)
    logZ = jax.scipy.special.logsumexp(x, axis=-1)
    tgt_logit = jnp.take_along_axis(x, t[:, None], axis=-1)[:, 0]
    logpt = tgt_logit - logZ
    pt = jnp.exp(logpt)
    focal = -((1.0 - pt) ** gamma) * logpt
    return alpha * jnp.mean(focal)


if __name__ == "__main__":
    key = jax.random.PRNGKey(0)
    k1, k2, k3, k4, k5, k6 = jax.random.split(key, 6)

    # Primary check: module-implied shapes (HW already a multiple of 128).
    N, C, H, W = 2, 4, 16, 16
    inputs = jax.random.normal(k1, (N, C, H, W), dtype=jnp.float32)
    targets = jax.random.randint(k2, (N, H, W), 0, C, dtype=jnp.int32)
    loss = focal_loss(inputs, targets)
    jax.block_until_ready(loss)
    ref = _reference(inputs, targets)
    assert jnp.allclose(loss, ref, rtol=1e-5, atol=1e-5), (loss, ref)

    # Secondary check: exercises the pad + tail-mask path (HW % 128 != 0).
    N2, C2, H2, W2 = 2, 3, 10, 10
    inputs2 = jax.random.normal(k3, (N2, C2, H2, W2), dtype=jnp.float32)
    targets2 = jax.random.randint(k4, (N2, H2, W2), 0, C2, dtype=jnp.int32)
    loss2 = focal_loss(inputs2, targets2)
    jax.block_until_ready(loss2)
    ref2 = _reference(inputs2, targets2)
    assert jnp.allclose(loss2, ref2, rtol=1e-5, atol=1e-5), (loss2, ref2)

    # Third check: exercises the aligned (S multiple of 8) group-sum path.
    N3, C3, H3, W3 = 2, 4, 32, 32
    inputs3 = jax.random.normal(k5, (N3, C3, H3, W3), dtype=jnp.float32)
    targets3 = jax.random.randint(k6, (N3, H3, W3), 0, C3, dtype=jnp.int32)
    loss3 = focal_loss(inputs3, targets3)
    jax.block_until_ready(loss3)
    ref3 = _reference(inputs3, targets3)
    assert jnp.allclose(loss3, ref3, rtol=1e-5, atol=1e-5), (loss3, ref3)

    print("KERNEL_OK")
</pallas_src>

<mosaic_0001>
module attributes {stable_mosaic.version = 11 : i64} {
  func.func @_focal_kernel(%arg0: i32, %arg1: i32, %arg2: memref<1x4x2x128xf32, #tpu.memory_space<vmem>>, %arg3: memref<1x2x128xi32, #tpu.memory_space<vmem>>, %arg4: memref<1x1x8x128xf32, #tpu.memory_space<vmem>>) attributes {dimension_semantics = [#tpu.dimension_semantics<parallel>, #tpu.dimension_semantics<parallel>], iteration_bounds = array<i64: 2, 1>, scalar_prefetch = 0 : i64, scratch_operands = 0 : i64, tpu.core_type = #tpu.core_type<tc>, window_params = [{transform_indices = @transform_0, window_bounds = array<i64: 1, 4, 2, 128>}, {transform_indices = @transform_1, window_bounds = array<i64: 1, 2, 128>}, {transform_indices = @transform_2, window_bounds = array<i64: 1, 1, 8, 128>}]} {
    %c0 = arith.constant 0 : index
    %c0_0 = arith.constant 0 : index
    %c0_1 = arith.constant 0 : index
    %0 = vector.load %arg3[%c0, %c0_0, %c0_1] : memref<1x2x128xi32, #tpu.memory_space<vmem>>, vector<1x2x128xi32>
    %1 = vector.shape_cast %0 : vector<1x2x128xi32> to vector<2x128xi32>
    %c0_2 = arith.constant 0 : index
    %c0_3 = arith.constant 0 : index
    %c0_4 = arith.constant 0 : index
    %c0_5 = arith.constant 0 : index
    %2 = vector.load %arg2[%c0_2, %c0_3, %c0_4, %c0_5] : memref<1x4x2x128xf32, #tpu.memory_space<vmem>>, vector<1x1x2x128xf32>
    %3 = vector.shape_cast %2 : vector<1x1x2x128xf32> to vector<2x128xf32>
    %c0_6 = arith.constant 0 : index
    %c1 = arith.constant 1 : index
    %c0_7 = arith.constant 0 : index
    %c0_8 = arith.constant 0 : index
    %4 = vector.load %arg2[%c0_6, %c1, %c0_7, %c0_8] : memref<1x4x2x128xf32, #tpu.memory_space<vmem>>, vector<1x1x2x128xf32>
    %5 = vector.shape_cast %4 : vector<1x1x2x128xf32> to vector<2x128xf32>
    %6 = arith.maximumf %3, %5 : vector<2x128xf32>
    %c0_9 = arith.constant 0 : index
    %c2 = arith.constant 2 : index
    %c0_10 = arith.constant 0 : index
    %c0_11 = arith.constant 0 : index
    %7 = vector.load %arg2[%c0_9, %c2, %c0_10, %c0_11] : memref<1x4x2x128xf32, #tpu.memory_space<vmem>>, vector<1x1x2x128xf32>
    %8 = vector.shape_cast %7 : vector<1x1x2x128xf32> to vector<2x128xf32>
    %9 = arith.maximumf %6, %8 : vector<2x128xf32>
    %c0_12 = arith.constant 0 : index
    %c3 = arith.constant 3 : index
    %c0_13 = arith.constant 0 : index
    %c0_14 = arith.constant 0 : index
    %10 = vector.load %arg2[%c0_12, %c3, %c0_13, %c0_14] : memref<1x4x2x128xf32, #tpu.memory_space<vmem>>, vector<1x1x2x128xf32>
    %11 = vector.shape_cast %10 : vector<1x1x2x128xf32> to vector<2x128xf32>
    %12 = arith.maximumf %9, %11 : vector<2x128xf32>
    %cst = arith.constant 0.000000e+00 : f32
    %13 = vector.broadcast %cst : f32 to vector<2x128xf32>
    %cst_15 = arith.constant 0.000000e+00 : f32
    %14 = vector.broadcast %cst_15 : f32 to vector<2x128xf32>
    %c0_16 = arith.constant 0 : index
    %c0_17 = arith.constant 0 : index
    %c0_18 = arith.constant 0 : index
    %c0_19 = arith.constant 0 : index
    %15 = vector.load %arg2[%c0_16, %c0_17, %c0_18, %c0_19] : memref<1x4x2x128xf32, #tpu.memory_space<vmem>>, vector<1x1x2x128xf32>
    %16 = vector.shape_cast %15 : vector<1x1x2x128xf32> to vector<2x128xf32>
    %17 = arith.subf %16, %12 : vector<2x128xf32>
    %18 = math.exp %17 : vector<2x128xf32>
    %19 = arith.addf %13, %18 : vector<2x128xf32>
    %c0_i32 = arith.constant 0 : i32
    %20 = vector.broadcast %c0_i32 : i32 to vector<2x128xi32>
    %21 = arith.cmpi eq, %1, %20 : vector<2x128xi32>
    %cst_20 = arith.constant 0.000000e+00 : f32
    %22 = vector.broadcast %cst_20 : f32 to vector<2x128xf32>
    %23 = arith.select %21, %16, %22 : vector<2x128xi1>, vector<2x128xf32>
    %24 = arith.addf %14, %23 : vector<2x128xf32>
    %c0_21 = arith.constant 0 : index
    %c1_22 = arith.constant 1 : index
    %c0_23 = arith.constant 0 : index
    %c0_24 = arith.constant 0 : index
    %25 = vector.load %arg2[%c0_21, %c1_22, %c0_23, %c0_24] : memref<1x4x2x128xf32, #tpu.memory_space<vmem>>, vector<1x1x2x128xf32>
    %26 = vector.shape_cast %25 : vector<1x1x2x128xf32> to vector<2x128xf32>
    %27 = arith.subf %26, %12 : vector<2x128xf32>
    %28 = math.exp %27 : vector<2x128xf32>
    %29 = arith.addf %19, %28 : vector<2x128xf32>
    %c1_i32 = arith.constant 1 : i32
    %30 = vector.broadcast %c1_i32 : i32 to vector<2x128xi32>
    %31 = arith.cmpi eq, %1, %30 : vector<2x128xi32>
    %cst_25 = arith.constant 0.000000e+00 : f32
    %32 = vector.broadcast %cst_25 : f32 to vector<2x128xf32>
    %33 = arith.select %31, %26, %32 : vector<2x128xi1>, vector<2x128xf32>
    %34 = arith.addf %24, %33 : vector<2x128xf32>
    %c0_26 = arith.constant 0 : index
    %c2_27 = arith.constant 2 : index
    %c0_28 = arith.constant 0 : index
    %c0_29 = arith.constant 0 : index
    %35 = vector.load %arg2[%c0_26, %c2_27, %c0_28, %c0_29] : memref<1x4x2x128xf32, #tpu.memory_space<vmem>>, vector<1x1x2x128xf32>
    %36 = vector.shape_cast %35 : vector<1x1x2x128xf32> to vector<2x128xf32>
    %37 = arith.subf %36, %12 : vector<2x128xf32>
    %38 = math.exp %37 : vector<2x128xf32>
    %39 = arith.addf %29, %38 : vector<2x128xf32>
    %c2_i32 = arith.constant 2 : i32
    %40 = vector.broadcast %c2_i32 : i32 to vector<2x128xi32>
    %41 = arith.cmpi eq, %1, %40 : vector<2x128xi32>
    %cst_30 = arith.constant 0.000000e+00 : f32
    %42 = vector.broadcast %cst_30 : f32 to vector<2x128xf32>
    %43 = arith.select %41, %36, %42 : vector<2x128xi1>, vector<2x128xf32>
    %44 = arith.addf %34, %43 : vector<2x128xf32>
    %c0_31 = arith.constant 0 : index
    %c3_32 = arith.constant 3 : index
    %c0_33 = arith.constant 0 : index
    %c0_34 = arith.constant 0 : index
    %45 = vector.load %arg2[%c0_31, %c3_32, %c0_33, %c0_34] : memref<1x4x2x128xf32, #tpu.memory_space<vmem>>, vector<1x1x2x128xf32>
    %46 = vector.shape_cast %45 : vector<1x1x2x128xf32> to vector<2x128xf32>
    %47 = arith.subf %46, %12 : vector<2x128xf32>
    %48 = math.exp %47 : vector<2x128xf32>
    %49 = arith.addf %39, %48 : vector<2x128xf32>
    %c3_i32 = arith.constant 3 : i32
    %50 = vector.broadcast %c3_i32 : i32 to vector<2x128xi32>
    %51 = arith.cmpi eq, %1, %50 : vector<2x128xi32>
    %cst_35 = arith.constant 0.000000e+00 : f32
    %52 = vector.broadcast %cst_35 : f32 to vector<2x128xf32>
    %53 = arith.select %51, %46, %52 : vector<2x128xi1>, vector<2x128xf32>
    %54 = arith.addf %44, %53 : vector<2x128xf32>
    %55 = arith.subf %54, %12 : vector<2x128xf32>
    %56 = math.log %49 : vector<2x128xf32>
    %57 = arith.subf %55, %56 : vector<2x128xf32>
    %58 = math.exp %57 : vector<2x128xf32>
    %cst_36 = arith.constant 1.000000e+00 : f32
    %59 = vector.broadcast %cst_36 : f32 to vector<2x128xf32>
    %60 = arith.subf %59, %58 : vector<2x128xf32>
    %61 = arith.mulf %60, %60 : vector<2x128xf32>
    %cst_37 = arith.constant 0.000000e+00 : f32
    %62 = vector.broadcast %cst_37 : f32 to vector<2x128xf32>
    %63 = arith.subf %62, %61 : vector<2x128xf32>
    %64 = arith.mulf %63, %57 : vector<2x128xf32>
    %cst_38 = arith.constant dense<0.000000e+00> : vector<128xf32>
    %65 = vector.multi_reduction <add>, %64, %cst_38 [0] : vector<2x128xf32> to vector<128xf32>
    %66 = vector.shape_cast %65 : vector<128xf32> to vector<1x128xf32>
    %67 = tpu.iota {dimensions = array<i32: 0>} : vector<8x128xi32>
    %c0_i32_39 = arith.constant 0 : i32
    %68 = vector.broadcast %c0_i32_39 : i32 to vector<8x128xi32>
    %69 = arith.cmpi eq, %67, %68 : vector<8x128xi32>
    %cst_40 = arith.constant 0.000000e+00 : f32
    %70 = vector.shape_cast %66 : vector<1x128xf32> to vector<1x128xf32>
    %71 = vector.broadcast %70 : vector<1x128xf32> to vector<8x128xf32>
    %72 = vector.broadcast %cst_40 : f32 to vector<8x128xf32>
    %73 = arith.select %69, %71, %72 : vector<8x128xi1>, vector<8x128xf32>
    %c0_41 = arith.constant 0 : index
    %c0_42 = arith.constant 0 : index
    %c0_43 = arith.constant 0 : index
    %c0_44 = arith.constant 0 : index
    %74 = vector.load %arg4[%c0_41, %c0_42, %c0_43, %c0_44] : memref<1x1x8x128xf32, #tpu.memory_space<vmem>>, vector<1x1x8x128xf32>
    %75 = vector.shape_cast %74 : vector<1x1x8x128xf32> to vector<8x128xf32>
    %76 = vector.shape_cast %73 : vector<8x128xf32> to vector<1x1x8x128xf32>
    tpu.vector_store %arg4[%c0_41, %c0_42, %c0_43, %c0_44], %76 {strides = array<i32>} : memref<1x1x8x128xf32, #tpu.memory_space<vmem>>, vector<1x1x8x128xf32>,
    return
  }
  func.func @transform_0(%arg0: i32, %arg1: i32) -> (i32, i32, i32, i32) {
    %c0_i32 = arith.constant 0 : i32
    %c0_i32_0 = arith.constant 0 : i32
    %c0_i32_1 = arith.constant 0 : i32
    return %arg0, %c0_i32, %arg1, %c0_i32_0 : i32, i32, i32, i32
  }
  func.func @transform_1(%arg0: i32, %arg1: i32) -> (i32, i32, i32) {
    %c0_i32 = arith.constant 0 : i32
    %c0_i32_0 = arith.constant 0 : i32
    return %arg0, %arg1, %c0_i32 : i32, i32, i32
  }
  func.func @transform_2(%arg0: i32, %arg1: i32) -> (i32, i32, i32, i32) {
    %c0_i32 = arith.constant 0 : i32
    %c0_i32_0 = arith.constant 0 : i32
    %c0_i32_1 = arith.constant 0 : i32
    return %arg0, %arg1, %c0_i32, %c0_i32_0 : i32, i32, i32, i32
  }
}

</mosaic_0001>

<llo_original>
// kernel: tpu_custom_call.1
$region0: #{tpu_custom_call.1}
  #allocation0 [shape = 'u32[]', space=smem, size = 0x4, offset = 0x4, fixed_abs, tag = 'smem constant byte address 0x4 - core index']
  #allocation1 [shape = 'u32[144,128]{1,0:T(1,128)}', space=vmem, size = 0x12000, scoped, tag = 'internal scratch']
  %s0 = inlined_call_operand.hbm [shape: f32[2,4,2,128], index: 0, kind: input, shape index: {}]
  %s1 = inlined_call_operand.hbm [shape: s32[2,2,128], index: 1, kind: input, shape index: {}]
  %s2 = inlined_call_operand.hbm [shape: f32[2,1,8,128], index: 2, kind: output, shape index: {}]
  %s3 = sld [smem:[#allocation0]]
  $region49: #{tpu_custom_call.1} parent=0
    _
  %s5 = ssub.s32 1, %s3
  %s6 = scalar_select 0, %s5, %s3
  $region1: #{tpu_custom_call.1} parent=0
    #allocation2 [shape = 'u8[8192]{0}', space=vmem, size = 0x2000, scoped, tag = 'input window, operand 0']
    #allocation3 [shape = 's32[2]{0}', space=sflag, size = 0x8, scoped, tag = 'scoped memory for tpu_custom_call.1']
    #allocation4 [shape = 's32[2]{0}', space=sflag, size = 0x8, scoped, tag = 'scoped memory for tpu_custom_call.1']
    #allocation5 [shape = 'u8[2048]{0}', space=vmem, size = 0x800, scoped, tag = 'input window, operand 1']
    #allocation6 [shape = 's32[2]{0}', space=sflag, size = 0x8, scoped, tag = 'scoped memory for tpu_custom_call.1']
    #allocation7 [shape = 'u8[8192]{0}', space=vmem, size = 0x2000, scoped, tag = 'output window, operand 0']
    %7 = vsyncpa [#allocation3], 0
    %s8 = scalar_lea.sflag [#allocation3], 1
    %9 = vsyncpa %s8, 0
    %10 = vsyncpa [#allocation6], 0
    %s11 = scalar_lea.sflag [#allocation6], 1
    %12 = vsyncpa %s11, 0
    %13 = vsyncpa [#allocation4], 0
    %s14 = scalar_lea.sflag [#allocation4], 1
    %15 = vsyncpa %s14, 0
    loop: start=0, step=1, limit=4
    $region2: #{tpu_custom_call.1} parent=1 // loop_pre_header
      _
    $region3: #{tpu_custom_call.1} parent=1 // loop_header
      %s17 = sphi 0, %s21
      %p18 = scmp.ge.s32.totalorder %s17, 4
      %s24 = sphi 0, %s36
      %s25 = sphi 0, %s32
      %s26 = sphi 0, %s24
      %s27 = sphi 0, %s25
      %s28 = sphi 0, %s26
      %s29 = sphi 0, %s27
      %s41 = sphi 0, %s43
      %s44 = sphi 0, %s41
      %s45 = sphi 0, %s44
      %s61 = sphi 0, %s45
      %s69 = sphi 0, %s71
      %s72 = sphi 0, %s69
      %s73 = sphi 0, %s72
      %s89 = sphi 0, %s73
      %s97 = sphi 0, %s99
      %s100 = sphi 0, %s97
      %s101 = sphi 0, %s100
      %s117 = sphi 0, %s101
    $region4: #{tpu_custom_call.1} parent=1 // loop_header_branch
      %20 = sbr.rel (%p18) target = $region8
    $region5: #{tpu_custom_call.1} parent=1 // loop_body
      %s22 = ssub.s32 %s17, 1
      %s23 = ssub.s32 %s17, 2
      %s30 = sadd.s32 1, %s25
      %p31 = scmp.ge.s32.totalorder %s30, 1
      %s32 = scalar_select %p31, 0, %s30
      %s33 = sadd.s32 1, %s24
      %s34 = scalar_select %p31, %s33, %s24
      %p35 = scmp.ge.s32.totalorder %s34, 2
      %s36 = scalar_select %p35, 0, %s34
      %s37 = ssub.s32 %s24, %s36
      %s38 = ssub.s32 %s25, %s32
      %s39 = sor.u32 %s37, %s38
      %p40 = scmp.eq.s32.totalorder %s39, 0
      %s42 = sadd.s32 %s41, 1
      %s43 = scalar_select %p40, %s41, %s42
      %p46 = pneg %p40
      %p47 = scmp.eq.s32.totalorder %s17, 1
      %p48 = por %p46, %p47
      %p49 = scmp.ne.s32.totalorder %s41, %s44
      %p50 = scmp.eq.s32.totalorder %s17, 0
      %p51 = por %p49, %p50
      %p52 = scmp.ne.s32.totalorder %s41, %s44
      %p53 = scmp.eq.s32.totalorder %s22, 1
      %p54 = por %p52, %p53
      %p55 = scmp.ne.s32.totalorder %s44, %s45
      %p56 = scmp.eq.s32.totalorder %s22, 0
      %p57 = por %p55, %p56
      %p58 = scmp.ne.s32.totalorder %s44, %s45
      %p59 = scmp.eq.s32.totalorder %s23, 1
      %p60 = por %p58, %p59
      %p62 = scmp.ne.s32.totalorder %s45, %s61
      %p63 = scmp.eq.s32.totalorder %s23, 0
      %p64 = por %p62, %p63
      %s65 = ssub.s32 %s24, %s36
      %s66 = ssub.s32 %s25, %s32
      %s67 = sor.u32 %s65, %s66
      %p68 = scmp.eq.s32.totalorder %s67, 0
      %s70 = sadd.s32 %s69, 1
      %s71 = scalar_select %p68, %s69, %s70
      %p74 = pneg %p68
      %p75 = scmp.eq.s32.totalorder %s17, 1
      %p76 = por %p74, %p75
      %p77 = scmp.ne.s32.totalorder %s69, %s72
      %p78 = scmp.eq.s32.totalorder %s17, 0
      %p79 = por %p77, %p78
      %p80 = scmp.ne.s32.totalorder %s69, %s72
      %p81 = scmp.eq.s32.totalorder %s22, 1
      %p82 = por %p80, %p81
      %p83 = scmp.ne.s32.totalorder %s72, %s73
      %p84 = scmp.eq.s32.totalorder %s22, 0
      %p85 = por %p83, %p84
      %p86 = scmp.ne.s32.totalorder %s72, %s73
      %p87 = scmp.eq.s32.totalorder %s23, 1
      %p88 = por %p86, %p87
      %p90 = scmp.ne.s32.totalorder %s73, %s89
      %p91 = scmp.eq.s32.totalorder %s23, 0
      %p92 = por %p90, %p91
      %s93 = ssub.s32 %s24, %s36
      %s94 = ssub.s32 %s25, %s32
      %s95 = sor.u32 %s93, %s94
      %p96 = scmp.eq.s32.totalorder %s95, 0
      %s98 = sadd.s32 %s97, 1
      %s99 = scalar_select %p96, %s97, %s98
      %p102 = pneg %p96
      %p103 = scmp.eq.s32.totalorder %s17, 1
      %p104 = por %p102, %p103
      %p105 = scmp.ne.s32.totalorder %s97, %s100
      %p106 = scmp.eq.s32.totalorder %s17, 0
      %p107 = por %p105, %p106
      %p108 = scmp.ne.s32.totalorder %s97, %s100
      %p109 = scmp.eq.s32.totalorder %s22, 1
      %p110 = por %p108, %p109
      %p111 = scmp.ne.s32.totalorder %s100, %s101
      %p112 = scmp.eq.s32.totalorder %s22, 0
      %p113 = por %p111, %p112
      %p114 = scmp.ne.s32.totalorder %s100, %s101
      %p115 = scmp.eq.s32.totalorder %s23, 1
      %p116 = por %p114, %p115
      %p118 = scmp.ne.s32.totalorder %s101, %s117
      %p119 = scmp.eq.s32.totalorder %s23, 0
      %p120 = por %p118, %p119
      %p121 = scmp.le.s32.totalorder 1, %s17
      %p122 = scmp.lt.s32.totalorder %s17, 3
      %p123 = pnand %p121, %p122
      %p124 = pneg %p123
      // Predicated region
      $region9: #{tpu_custom_call.1} parent=5 // pred_check
        _
      $region10: #{tpu_custom_call.1} parent=5 // pred_check_branch
        %126 = sbr.rel (%p123) target = $region12
      $region11: #{tpu_custom_call.1} parent=5 // pred_region
        %s127 = ssub.s32 %s17, 1
      $region12: #{tpu_custom_call.1} parent=5 // pred_fallthru
        _
      %p128 = scmp.lt.s32.totalorder %s17, 2
      // Predicated region
      $region13: #{tpu_custom_call.1} parent=5 // pred_check
        %p129 = pneg %p128
      $region14: #{tpu_custom_call.1} parent=5 // pred_check_branch
        %131 = sbr.rel (%p129) target = $region16
      $region15: #{tpu_custom_call.1} parent=5 // pred_region
        // Predicated region
        $region17: #{tpu_custom_call.1} parent=15 // pred_check
          %p132 = pneg %p51
        $region18: #{tpu_custom_call.1} parent=15 // pred_check_branch
          %134 = sbr.rel (%p132) target = $region20
        $region19: #{tpu_custom_call.1} parent=15 // pred_region
          %s135 = sand.u32 %s41, 1
          %s136 = scalar_lea.sflag [#allocation3], %s135
          %s137 = sand.u32 %s41, 1
          %s138 = smul.addr %s137, 8
          %s139 = scalar_lea.vmem [#allocation2], %s138
          %s141 = ssub.s32 128, 128
          %142 = vsyncadd %s136, %s141
          %s143 = smul.addr %s24, 4
          %s144 = sadd.s32 %s25, %s143
          %s145 = smul.addr %s144, 32
          %s146 = scalar_lea.hbm %s0, %s145
          %s147 = sshll.u32 %s139, 4
          %s148 = int_to_ptr.vmem [resolvable:$true] %s147
          %153 = dma.hbm_to_vmem [thread:$0]  %s146, 128, %s148, %s136, 32, 32, 2
        $region20: #{tpu_custom_call.1} parent=15 // pred_fallthru
          _
        // Predicated region
        $region21: #{tpu_custom_call.1} parent=15 // pred_check
          %p154 = pneg %p79
        $region22: #{tpu_custom_call.1} parent=15 // pred_check_branch
          %156 = sbr.rel (%p154) target = $region24
        $region23: #{tpu_custom_call.1} parent=15 // pred_region
          %s157 = sand.u32 %s69, 1
          %s158 = scalar_lea.sflag [#allocation6], %s157
          %s159 = sand.u32 %s69, 1
          %s160 = smul.addr %s159, 2
          %s161 = scalar_lea.vmem [#allocation5], %s160
          %s163 = ssub.s32 32, 32
          %164 = vsyncadd %s158, %s163
          %s165 = sadd.s32 %s25, %s24
          %s166 = smul.addr %s165, 32
          %s167 = scalar_lea.hbm %s1, %s166
          %s169 = sshll.u32 %s161, 4
          %s170 = int_to_ptr.vmem [resolvable:$true] %s169
          %172 = dma.hbm_to_vmem [thread:$0]  %s167, 32, %s170, %s158
        $region24: #{tpu_custom_call.1} parent=15 // pred_fallthru
          _
      $region16: #{tpu_custom_call.1} parent=5 // pred_fallthru
        _
      %p173 = scmp.le.s32.totalorder 1, %s17
      %p174 = scmp.lt.s32.totalorder %s17, 3
      %p175 = pnand %p173, %p174
      %p176 = pneg %p175
      // Predicated region
      $region25: #{tpu_custom_call.1} parent=5 // pred_check
        _
      $region26: #{tpu_custom_call.1} parent=5 // pred_check_branch
        %178 = sbr.rel (%p175) target = $region28
      $region27: #{tpu_custom_call.1} parent=5 // pred_region
        %s179 = ssub.s32 %s17, 1
        %s180 = sand.u32 %s44, 1
        %s181 = scalar_lea.sflag [#allocation3], %s180
        %s182 = sand.u32 %s44, 1
        %s183 = smul.addr %s182, 8
        %s184 = scalar_lea.vmem [#allocation2], %s183
        // Predicated region
        $region29: #{tpu_custom_call.1} parent=27 // pred_check
          %p185 = pneg %p57
        $region30: #{tpu_custom_call.1} parent=27 // pred_check_branch
          %187 = sbr.rel (%p185) target = $region32
        $region31: #{tpu_custom_call.1} parent=27 // pred_region
          %188 = dma.done %s181, 128
        $region32: #{tpu_custom_call.1} parent=27 // pred_fallthru
          _
        %s189 = sand.u32 %s72, 1
        %s190 = scalar_lea.sflag [#allocation6], %s189
        %s191 = sand.u32 %s72, 1
        %s192 = smul.addr %s191, 2
        %s193 = scalar_lea.vmem [#allocation5], %s192
        // Predicated region
        $region33: #{tpu_custom_call.1} parent=27 // pred_check
          %p194 = pneg %p85
        $region34: #{tpu_custom_call.1} parent=27 // pred_check_branch
          %196 = sbr.rel (%p194) target = $region36
        $region35: #{tpu_custom_call.1} parent=27 // pred_region
          %197 = dma.done %s190, 32
        $region36: #{tpu_custom_call.1} parent=27 // pred_fallthru
          _
        %s198 = sand.u32 %s44, 1
        %s199 = scalar_lea.sflag [#allocation3], %s198
        %s200 = sand.u32 %s44, 1
        %s201 = smul.addr %s200, 8
        %s202 = scalar_lea.vmem [#allocation2], %s201
        %p203 = pneg %p57
        %p204 = pneg %p54
        %s205 = sand.u32 %s72, 1
        %s206 = scalar_lea.sflag [#allocation6], %s205
        %s207 = sand.u32 %s72, 1
        %s208 = smul.addr %s207, 2
        %s209 = scalar_lea.vmem [#allocation5], %s208
        %p210 = pneg %p85
        %p211 = pneg %p82
        %p212 = pneg %p113
        %p213 = pneg %p110
        %s214 = sand.u32 %s100, 1
        %s215 = scalar_lea.sflag [#allocation4], %s214
        %s216 = sand.u32 %s100, 1
        %s217 = smul.addr %s216, 8
        %s218 = scalar_lea.vmem [#allocation7], %s217
        %v219 = vld [vmem:[%s193] sm:$0x3]
        %v220 = vld [vmem:[%s184] sm:$0x3]
        %s221 = scalar_lea.vmem %s184, 2 [#allocation2]
        %v222 = vld [vmem:[%s221] sm:$0x3]
        %v223 = vmax.f32 %v220, %v222
        %s224 = scalar_lea.vmem %s184, 4 [#allocation2]
        %v225 = vld [vmem:[%s224] sm:$0x3]
        %v226 = vmax.f32 %v223, %v225
        %s227 = scalar_lea.vmem %s184, 6 [#allocation2]
        %v228 = vld [vmem:[%s227] sm:$0x3]
        %v229 = vmax.f32 %v226, %v228
        %v230 = vsub.f32 %v220, %v229
        %v231 = vmul.f32 %v230, 1.442695
        %v232 = vpow.pop %v231
        %v233 = vadd.f32 %v232, 0.0
        %vm234 = vcmp.eq.s32.totalorder %v219, 0
        %v235 = vsel %vm234, %v220, 0.0
        %v236 = vadd.f32 %v235, 0.0
        %v237 = vsub.f32 %v222, %v229
        %v238 = vmul.f32 %v237, 1.442695
        %v239 = vpow.pop %v238
        %v240 = vadd.f32 %v233, %v239
        %vm241 = vcmp.eq.s32.totalorder %v219, 1
        %v242 = vsel %vm241, %v222, 0.0
        %v243 = vadd.f32 %v236, %v242
        %v244 = vsub.f32 %v225, %v229
        %v245 = vmul.f32 %v244, 1.442695
        %v246 = vpow.pop %v245
        %v247 = vadd.f32 %v240, %v246
        %vm248 = vcmp.eq.s32.totalorder %v219, 2
        %v249 = vsel %vm248, %v225, 0.0
        %v250 = vadd.f32 %v243, %v249
        %v251 = vsub.f32 %v228, %v229
        %v252 = vmul.f32 %v251, 1.442695
        %v253 = vpow.pop %v252
        %v254 = vadd.f32 %v247, %v253
        %vm255 = vcmp.eq.s32.totalorder %v219, 3
        %v256 = vsel %vm255, %v228, 0.0
        %v257 = vadd.f32 %v250, %v256
        %v258 = vsub.f32 %v257, %v229
        %v259 = vlog2.pop %v254
        %v260 = vmul.f32 %v259, 0.6931472
        %v261 = vsub.f32 %v258, %v260
        %v262 = vmul.f32 %v261, 1.442695
        %v263 = vpow.pop %v262
        %v264 = vsub.f32 1.0, %v263
        %v265 = vmul.f32 %v264, %v264
        %v266 = vsub.f32 0.0, %v265
        %v267 = vmul.f32 %v266, %v261
        %vm268 = vcmask 1041408
        %v269 = vsel %vm268, %v267, 0.0
        %v270 = vrot.slane %v269, 4
        %v271 = vadd.f32 %v269, %v270
        %v272 = vrot.slane %v271, 2
        %v273 = vadd.f32 %v271, %v272
        %v274 = vrot.slane %v273, 1
        %v275 = vadd.f32 %v273, %v274
        %v276 = vlaneseq
        %v277 = vshrl.u32 %v276, 7
        %vm278 = vcmp.eq.s32.totalorder %v277, 0
        %v279 = vsel %vm278, %v275, 0.0
        %280 = vst [vmem:[%s218] sm:$0xff] %v279
        %s281 = sand.u32 %s100, 1
        %s282 = scalar_lea.sflag [#allocation4], %s281
        %s283 = sand.u32 %s100, 1
        %s284 = smul.addr %s283, 8
        %s285 = scalar_lea.vmem [#allocation7], %s284
        // Predicated region
        $region37: #{tpu_custom_call.1} parent=27 // pred_check
          %p286 = pneg %p110
        $region38: #{tpu_custom_call.1} parent=27 // pred_check_branch
          %288 = sbr.rel (%p286) target = $region40
        $region39: #{tpu_custom_call.1} parent=27 // pred_region
          %s290 = ssub.s32 128, 128
          %291 = vsyncadd %s282, %s290
          %s292 = sadd.s32 %s27, %s26
          %s293 = smul.addr %s292, 128
          %s294 = scalar_lea.hbm %s2, %s293
          %s296 = sshll.u32 %s285, 4
          %s297 = int_to_ptr.vmem [resolvable:$true] %s296
          %299 = dma.vmem_to_hbm [thread:$0]  %s297, 128, %s294, %s282
        $region40: #{tpu_custom_call.1} parent=27 // pred_fallthru
          _
      $region28: #{tpu_custom_call.1} parent=5 // pred_fallthru
        _
      %p300 = scmp.le.s32.totalorder 2, %s17
      // Predicated region
      $region41: #{tpu_custom_call.1} parent=5 // pred_check
        %p301 = pneg %p300
      $region42: #{tpu_custom_call.1} parent=5 // pred_check_branch
        %303 = sbr.rel (%p301) target = $region44
      $region43: #{tpu_custom_call.1} parent=5 // pred_region
        %s304 = ssub.s32 %s17, 2
        // Predicated region
        $region45: #{tpu_custom_call.1} parent=43 // pred_check
          %p305 = pneg %p116
        $region46: #{tpu_custom_call.1} parent=43 // pred_check_branch
          %307 = sbr.rel (%p305) target = $region48
        $region47: #{tpu_custom_call.1} parent=43 // pred_region
          %s308 = sand.u32 %s101, 1
          %s309 = scalar_lea.sflag [#allocation4], %s308
          %s310 = sand.u32 %s101, 1
          %s311 = smul.addr %s310, 8
          %s312 = scalar_lea.vmem [#allocation7], %s311
          %313 = dma.done %s309, 128
        $region48: #{tpu_custom_call.1} parent=43 // pred_fallthru
          _
      $region44: #{tpu_custom_call.1} parent=5 // pred_fallthru
        _
    $region6: #{tpu_custom_call.1} parent=1 // loop_footer
      %s21 = sadd.s32 1, %s17
    $region7: #{tpu_custom_call.1} parent=1 // loop_footer_branch
      %16 = sbr.rel target = $region3
    $region8: #{tpu_custom_call.1} parent=1 // loop_exit
      _
    %314 = vsyncpa [#allocation3], 1
    %s315 = scalar_lea.sflag [#allocation3], 1
    %316 = vsyncpa %s315, 1
    %317 = vsyncpa [#allocation6], 1
    %s318 = scalar_lea.sflag [#allocation6], 1
    %319 = vsyncpa %s318, 1
    %320 = vsyncpa [#allocation4], 1
    %s321 = scalar_lea.sflag [#allocation4], 1
    %322 = vsyncpa %s321, 1

</llo_original>
